<compile_context>
chip_gen: v7x
topology: tpu7x:2x2x1
jax: 0.10.0
libtpu: 0.0.40
codegen_flags: <defaults>
</compile_context>

<pallas_src>
import functools

import jax
import jax.numpy as jnp
from jax.experimental import pallas as pl
from jax.experimental.pallas import tpu as pltpu

_TILE_HW = 32768   # pixels per grid step in kernel 1 (multiple of 128)
_ROW_TILE = 2048   # rows of 128 pixels per grid step in kernel 2


# ---------------------------------------------------------------------------
# Kernel 1: per-pixel softmax stats (+ optional class weight).
# ---------------------------------------------------------------------------
def _ohem_stats_kernel(logits_ref, tgt_ref, *rest, ignore_index, use_weight):
    if use_weight:
        wcol_ref, prob_ref, nll_ref, w_ref = rest
    else:
        prob_ref, nll_ref, w_ref = rest

    logits = logits_ref[...].astype(jnp.float32)          # (C, T)
    tgt = tgt_ref[...]                                     # (1, T) int32
    valid = tgt != ignore_index                            # (1, T) bool

    cls = jax.lax.broadcasted_iota(jnp.int32, logits.shape, 0)
    onehot = cls == tgt                                    # (C, T) bool

    m = jnp.max(logits, axis=0, keepdims=True)             # (1, T)
    e = jnp.exp(logits - m)
    lse = m + jnp.log(jnp.sum(e, axis=0, keepdims=True))   # logsumexp
    logit_t = jnp.sum(jnp.where(onehot, logits, 0.0), axis=0, keepdims=True)

    # Note: nll at ignored pixels is raw lse; every consumer multiplies by
    # w_base == 0 (or masks), so it never leaks into results.
    nll_ref[...] = lse - logit_t
    prob_ref[...] = jnp.where(valid, jnp.exp(logit_t - lse), jnp.float32(1.0))

    if use_weight:
        w_cls = jnp.sum(jnp.where(onehot, wcol_ref[...], 0.0),
                        axis=0, keepdims=True)             # weight[target]
        w_ref[...] = jnp.where(valid, w_cls, jnp.float32(0.0))
    else:
        w_ref[...] = valid.astype(jnp.float32)


def _ohem_stats(pred, target, ignore_index, class_weight=None, tile=_TILE_HW):
    """Returns (prob, nll, w_base), each shaped (b, 1, hw_pad) float32."""
    b, c, h, w = pred.shape
    hw = h * w
    hw_pad = pl.cdiv(hw, 128) * 128
    tile = min(tile, hw_pad)
    use_weight = class_weight is not None

    # Free reinterpretations of the NCHW buffer; logits keep their input dtype
    # (bf16 stays bf16 on the wire and is cast to f32 inside the kernel).
    logits = pred.reshape(b, c, hw)
    tgt = target.reshape(b, 1, hw).astype(jnp.int32)
    if hw_pad != hw:
        # TODO(synk): rare path (hw not a multiple of 128) still pays one pad
        # copy; padded pixels carry tgt=ignore_index so downstream ignores them.
        logits = jnp.pad(logits, ((0, 0), (0, 0), (0, hw_pad - hw)))
        tgt = jnp.pad(tgt, ((0, 0), (0, 0), (0, hw_pad - hw)),
                      constant_values=ignore_index)

    in_specs = [
        pl.BlockSpec((None, c, tile), lambda bi, ti: (bi, 0, ti)),
        pl.BlockSpec((None, 1, tile), lambda bi, ti: (bi, 0, ti)),
    ]
    args = [logits, tgt]
    if use_weight:
        in_specs.append(pl.BlockSpec((c, 1), lambda bi, ti: (0, 0)))
        args.append(class_weight.reshape(c, 1).astype(jnp.float32))

    out_sds = jax.ShapeDtypeStruct((b, 1, hw_pad), jnp.float32)
    out_spec = pl.BlockSpec((None, 1, tile), lambda bi, ti: (bi, 0, ti))

    kern = functools.partial(_ohem_stats_kernel, ignore_index=ignore_index,
                             use_weight=use_weight)
    prob, nll, w_base = pl.pallas_call(
        kern,
        out_shape=(out_sds, out_sds, out_sds),
        grid=(b, pl.cdiv(hw_pad, tile)),
        in_specs=in_specs,
        out_specs=(out_spec, out_spec, out_spec),
        compiler_params=pltpu.CompilerParams(
            dimension_semantics=("parallel", "parallel")),
    )(*args)
    return prob, nll, w_base


# ---------------------------------------------------------------------------
# Kernel 2: fused OHEM-keep + weighted masked-mean reduction.
# ---------------------------------------------------------------------------
def _masked_sum_kernel(thr_ref, nll_ref, prob_ref, w_ref,
                       sum_loss_ref, sum_w_ref, *, n_rows):
    i = pl.program_id(0)

    @pl.when(i == 0)
    def _():
        sum_loss_ref[...] = jnp.zeros_like(sum_loss_ref)
        sum_w_ref[...] = jnp.zeros_like(sum_w_ref)

    row_tile = nll_ref.shape[0]
    # Mask rows past the end of the array (ragged last grid step reads stale
    # VMEM, which must not reach the accumulators).
    row = i * row_tile + jax.lax.broadcasted_iota(jnp.int32, nll_ref.shape, 0)
    kept = jnp.logical_and(row < n_rows, prob_ref[...] <= thr_ref[...])
    w = jnp.where(kept, w_ref[...], 0.0)
    wl = jnp.where(kept, w_ref[...] * nll_ref[...], 0.0)
    sum_loss_ref[...] += jnp.sum(wl, axis=0, keepdims=True)
    sum_w_ref[...] += jnp.sum(w, axis=0, keepdims=True)


def _fused_masked_mean(nll, prob, w_base, threshold, row_tile=_ROW_TILE):
    # Contiguous reshapes only (free); total length is a multiple of 128.
    nll_f = nll.reshape(-1)
    prob_f = prob.reshape(-1)
    w_f = w_base.reshape(-1)
    n = nll_f.shape[0]
    n_pad = pl.cdiv(n, 1024) * 1024          # make rows a multiple of 8
    if n_pad != n:
        pad = n_pad - n                       # tiny-shape fallback only
        nll_f = jnp.pad(nll_f, (0, pad))
        prob_f = jnp.pad(prob_f, (0, pad))
        w_f = jnp.pad(w_f, (0, pad))          # w == 0 -> contributes nothing
    rows = n_pad // 128
    row_tile = min(row_tile, rows)
    thr_vec = jnp.full((1, 128), threshold, dtype=jnp.float32)

    kern = functools.partial(_masked_sum_kernel, n_rows=rows)
    sum_loss, sum_w = pl.pallas_call(
        kern,
        out_shape=(jax.ShapeDtypeStruct((1, 128), jnp.float32),
                   jax.ShapeDtypeStruct((1, 128), jnp.float32)),
        grid=(pl.cdiv(rows, row_tile),),
        in_specs=[
            pl.BlockSpec((1, 128), lambda i: (0, 0)),
            pl.BlockSpec((row_tile, 128), lambda i: (i, 0)),
            pl.BlockSpec((row_tile, 128), lambda i: (i, 0)),
            pl.BlockSpec((row_tile, 128), lambda i: (i, 0)),
        ],
        out_specs=(pl.BlockSpec((1, 128), lambda i: (0, 0)),
                   pl.BlockSpec((1, 128), lambda i: (0, 0))),
        compiler_params=pltpu.CompilerParams(
            dimension_semantics=("arbitrary",)),
    )(thr_vec, nll_f.reshape(rows, 128), prob_f.reshape(rows, 128),
      w_f.reshape(rows, 128))

    sl = jnp.sum(sum_loss)
    sw = jnp.sum(sum_w)
    # Guard the degenerate all-ignored case (PyTorch would return NaN here).
    return jnp.where(sw > 0, sl / sw, jnp.float32(0.0))


# ---------------------------------------------------------------------------
# Module wrapper.
# ---------------------------------------------------------------------------
_CITYSCAPES_WEIGHTS = jnp.array(
    [0.8373, 0.918, 0.866, 1.0345, 1.0166, 0.9969, 0.9754, 1.0489, 0.8786,
     1.0023, 0.9539, 0.9843, 1.1116, 0.9037, 1.0865, 1.0955, 1.0865, 1.1529,
     1.0507], dtype=jnp.float32)


class OhemCrossEntropy:
    """JAX / Pallas port of the PyTorch OhemCrossEntropy module (forward only)."""

    def __init__(self, ignore_index=255, thresh=0.7, min_kept=100000,
                 use_weight=False, reduce=False):
        self.ignore_index = int(ignore_index)
        self.thresh = float(thresh)
        self.min_kept = int(min_kept)
        self.use_weight = bool(use_weight)
        self.reduce = bool(reduce)
        self.weight = _CITYSCAPES_WEIGHTS if use_weight else None

    def __call__(self, pred, target):
        b, c, h, w = pred.shape
        n = b * h * w
        if self.use_weight:
            assert c == self.weight.shape[0], "class weight table expects C=19"

        prob, nll, w_base = _ohem_stats(
            pred, target, self.ignore_index,
            self.weight if self.use_weight else None)

        if self.min_kept > 0:
            num_valid = jnp.sum(
                (target.reshape(-1) != self.ignore_index).astype(jnp.int32))
            # torch: skip OHEM when min_kept > num_valid; apply when num_valid > 0.
            apply_ohem = jnp.logical_and(num_valid >= self.min_kept,
                                         num_valid > 0)

            kk = min(n, self.min_kept)
            prob_flat = prob.reshape(-1)          # padded pixels carry prob=1.0
            count_le = jnp.sum((prob_flat <= self.thresh).astype(jnp.int32))

            def _kth_smallest():
                # TODO(synk): a Pallas histogram rank-select over prob would
                # avoid this sort-class op in the rare "too few easy pixels" case.
                neg_topk, _ = jax.lax.top_k(-prob_flat, kk)
                return -neg_topk[kk - 1]

            # count(prob <= thresh) >= k  <=>  k-th smallest <= thresh, in which
            # case torch uses exactly `thresh`; only otherwise is the k-th value
            # needed (and then it exceeds thresh).  Also skip when OHEM is off.
            skip_topk = jnp.logical_or(count_le >= kk,
                                       jnp.logical_not(apply_ohem))
            threshold = jax.lax.cond(skip_topk,
                                     lambda: jnp.float32(self.thresh),
                                     _kth_smallest)
            threshold = jnp.maximum(threshold, jnp.float32(self.thresh))
            # When OHEM does not apply, keep every valid pixel (probs <= 1 < 2).
            threshold = jnp.where(apply_ohem, threshold, jnp.float32(2.0))
        else:
            threshold = jnp.float32(2.0)

        if self.reduce and not self.use_weight:
            # reduction='none': per-pixel loss, 0 at ignored / dropped pixels.
            hw = h * w
            keep = jnp.logical_and(w_base > 0, prob <= threshold)
            out = jnp.where(keep, nll, 0.0)[:, 0, :hw]
            return out.reshape(b, h, w)

        # reduction='mean' (optionally class-weighted): sum(w*nll) / sum(w)
        return _fused_masked_mean(nll, prob, w_base, threshold)


# ---------------------------------------------------------------------------
# Pure-JAX references (mirror the torch forward semantics).
# ---------------------------------------------------------------------------
def _reference_mean(pred, target, ignore_index, thresh, min_kept, weight=None):
    b, c, h, w = pred.shape
    n = b * h * w
    tgt = target.reshape(-1).astype(jnp.int32)
    valid = tgt != ignore_index
    tgt0 = jnp.where(valid, tgt, 0)
    num_valid = int(jnp.sum(valid))
    logits = jnp.transpose(pred, (0, 2, 3, 1)).reshape(n, c).astype(jnp.float32)
    logp = jax.nn.log_softmax(logits, axis=-1)
    prob = jnp.exp(logp)
    idx = jnp.arange(n)
    mask_prob = jnp.where(valid, prob[idx, tgt0], 1.0)
    final_valid = valid
    if (min_kept <= num_valid) and (num_valid > 0) and (min_kept > 0):
        sorted_prob = jnp.sort(mask_prob)
        k = min(n, min_kept) - 1
        threshold = jnp.maximum(sorted_prob[k], thresh)
        final_valid = valid & (mask_prob <= threshold)
    nll = -logp[idx, tgt0]
    if weight is None:
        w_pix = final_valid.astype(jnp.float32)
    else:
        w_pix = weight[tgt0] * final_valid.astype(jnp.float32)
    return jnp.sum(nll * w_pix) / jnp.sum(w_pix)


def _reference_none(pred, target, ignore_index):
    logp = jax.nn.log_softmax(pred.astype(jnp.float32), axis=1)  # (b,c,h,w)
    tgt = target.astype(jnp.int32)
    valid = tgt != ignore_index
    tgt0 = jnp.where(valid, tgt, 0)
    nll = -jnp.take_along_axis(logp, tgt0[:, None, :, :], axis=1)[:, 0]
    return nll * valid.astype(jnp.float32)


if __name__ == "__main__":
    key = jax.random.PRNGKey(0)
    b, c, h, w = 2, 19, 16, 16
    k1, k2, k3 = jax.random.split(key, 3)

    pred = jax.random.normal(k1, (b, c, h, w), dtype=jnp.float32) * 3.0
    target = jax.random.randint(k2, (b, h, w), 0, c, dtype=jnp.int32)
    ignore = jax.random.uniform(k3, (b, h, w)) < 0.1
    target = jnp.where(ignore, 255, target)

    # Default config: min_kept (1e5) > num_valid -> plain masked-mean CE path.
    loss_default = OhemCrossEntropy()(pred, target)
    # Small min_kept so the OHEM hard-example-mining path is exercised.
    loss_ohem = OhemCrossEntropy(min_kept=64)(pred, target)
    # reduction='none' path.
    loss_none = OhemCrossEntropy(reduce=True)(pred, target)
    # Class-weighted mean path (exercises the in-kernel weight lookup).
    loss_weighted = OhemCrossEntropy(min_kept=64, use_weight=True)(pred, target)
    jax.block_until_ready((loss_default, loss_ohem, loss_none, loss_weighted))

    ref_default = _reference_mean(pred, target, 255, 0.7, 100000)
    ref_ohem = _reference_mean(pred, target, 255, 0.7, 64)
    ref_none = _reference_none(pred, target, 255)
    ref_weighted = _reference_mean(pred, target, 255, 0.7, 64,
                                   weight=_CITYSCAPES_WEIGHTS)

    assert jnp.allclose(loss_default, ref_default, rtol=1e-5, atol=1e-5), \
        (loss_default, ref_default)
    assert jnp.allclose(loss_ohem, ref_ohem, rtol=1e-5, atol=1e-5), \
        (loss_ohem, ref_ohem)
    assert jnp.allclose(loss_none, ref_none, rtol=1e-5, atol=1e-5)
    assert jnp.allclose(loss_weighted, ref_weighted, rtol=1e-5, atol=1e-5), \
        (loss_weighted, ref_weighted)

    print("KERNEL_OK")
</pallas_src>

<mosaic_0001>
module attributes {stable_mosaic.version = 11 : i64} {
  func.func @_ohem_stats_kernel(%arg0: i32, %arg1: i32, %arg2: memref<1x19x256xf32, #tpu.memory_space<vmem>>, %arg3: memref<1x1x256xi32, #tpu.memory_space<vmem>>, %arg4: memref<1x1x256xf32, #tpu.memory_space<vmem>>, %arg5: memref<1x1x256xf32, #tpu.memory_space<vmem>>, %arg6: memref<1x1x256xf32, #tpu.memory_space<vmem>>) attributes {dimension_semantics = [#tpu.dimension_semantics<parallel>, #tpu.dimension_semantics<parallel>], iteration_bounds = array<i64: 2, 1>, scalar_prefetch = 0 : i64, scratch_operands = 0 : i64, tpu.core_type = #tpu.core_type<tc>, window_params = [{transform_indices = @transform_0, window_bounds = array<i64: 1, 19, 256>}, {transform_indices = @transform_1, window_bounds = array<i64: 1, 1, 256>}, {transform_indices = @transform_2, window_bounds = array<i64: 1, 1, 256>}, {transform_indices = @transform_3, window_bounds = array<i64: 1, 1, 256>}, {transform_indices = @transform_4, window_bounds = array<i64: 1, 1, 256>}]} {
    %c0 = arith.constant 0 : index
    %c0_0 = arith.constant 0 : index
    %c0_1 = arith.constant 0 : index
    %0 = vector.load %arg2[%c0, %c0_0, %c0_1] : memref<1x19x256xf32, #tpu.memory_space<vmem>>, vector<1x19x256xf32>
    %1 = vector.shape_cast %0 : vector<1x19x256xf32> to vector<19x256xf32>
    %c0_2 = arith.constant 0 : index
    %c0_3 = arith.constant 0 : index
    %c0_4 = arith.constant 0 : index
    %2 = vector.load %arg3[%c0_2, %c0_3, %c0_4] : memref<1x1x256xi32, #tpu.memory_space<vmem>>, vector<1x1x256xi32>
    %3 = vector.shape_cast %2 : vector<1x1x256xi32> to vector<1x256xi32>
    %c255_i32 = arith.constant 255 : i32
    %4 = vector.broadcast %c255_i32 : i32 to vector<1x256xi32>
    %5 = arith.cmpi ne, %3, %4 : vector<1x256xi32>
    %6 = tpu.iota {dimensions = array<i32: 0>} : vector<19x256xi32>
    %7 = vector.broadcast %3 : vector<1x256xi32> to vector<19x256xi32>
    %8 = arith.cmpi eq, %6, %7 : vector<19x256xi32>
    %cst = arith.constant dense<0xFF800000> : vector<256xf32>
    %9 = vector.multi_reduction <maximumf>, %1, %cst [0] : vector<19x256xf32> to vector<256xf32>
    %10 = vector.shape_cast %9 : vector<256xf32> to vector<1x256xf32>
    %11 = vector.broadcast %10 : vector<1x256xf32> to vector<19x256xf32>
    %12 = arith.subf %1, %11 : vector<19x256xf32>
    %13 = math.exp %12 : vector<19x256xf32>
    %cst_5 = arith.constant dense<0.000000e+00> : vector<256xf32>
    %14 = vector.multi_reduction <add>, %13, %cst_5 [0] : vector<19x256xf32> to vector<256xf32>
    %15 = vector.shape_cast %14 : vector<256xf32> to vector<1x256xf32>
    %16 = math.log %15 : vector<1x256xf32>
    %17 = arith.addf %10, %16 : vector<1x256xf32>
    %cst_6 = arith.constant 0.000000e+00 : f32
    %18 = vector.broadcast %cst_6 : f32 to vector<19x256xf32>
    %19 = arith.select %8, %1, %18 : vector<19x256xi1>, vector<19x256xf32>
    %cst_7 = arith.constant dense<0.000000e+00> : vector<256xf32>
    %20 = vector.multi_reduction <add>, %19, %cst_7 [0] : vector<19x256xf32> to vector<256xf32>
    %21 = vector.shape_cast %20 : vector<256xf32> to vector<1x256xf32>
    %22 = arith.subf %17, %21 : vector<1x256xf32>
    %c0_8 = arith.constant 0 : index
    %c0_9 = arith.constant 0 : index
    %c0_10 = arith.constant 0 : index
    %23 = vector.load %arg5[%c0_8, %c0_9, %c0_10] : memref<1x1x256xf32, #tpu.memory_space<vmem>>, vector<1x1x256xf32>
    %24 = vector.shape_cast %23 : vector<1x1x256xf32> to vector<1x256xf32>
    %25 = vector.shape_cast %22 : vector<1x256xf32> to vector<1x1x256xf32>
    tpu.vector_store %arg5[%c0_8, %c0_9, %c0_10], %25 {strides = array<i32>} : memref<1x1x256xf32, #tpu.memory_space<vmem>>, vector<1x1x256xf32>,
    %26 = arith.subf %21, %17 : vector<1x256xf32>
    %27 = math.exp %26 : vector<1x256xf32>
    %cst_11 = arith.constant 1.000000e+00 : f32
    %28 = vector.broadcast %cst_11 : f32 to vector<1x256xf32>
    %29 = arith.select %5, %27, %28 : vector<1x256xi1>, vector<1x256xf32>
    %c0_12 = arith.constant 0 : index
    %c0_13 = arith.constant 0 : index
    %c0_14 = arith.constant 0 : index
    %30 = vector.load %arg4[%c0_12, %c0_13, %c0_14] : memref<1x1x256xf32, #tpu.memory_space<vmem>>, vector<1x1x256xf32>
    %31 = vector.shape_cast %30 : vector<1x1x256xf32> to vector<1x256xf32>
    %32 = vector.shape_cast %29 : vector<1x256xf32> to vector<1x1x256xf32>
    tpu.vector_store %arg4[%c0_12, %c0_13, %c0_14], %32 {strides = array<i32>} : memref<1x1x256xf32, #tpu.memory_space<vmem>>, vector<1x1x256xf32>,
    %33 = arith.extui %5 : vector<1x256xi1> to vector<1x256xi32>
    %34 = arith.sitofp %33 : vector<1x256xi32> to vector<1x256xf32>
    %c0_15 = arith.constant 0 : index
    %c0_16 = arith.constant 0 : index
    %c0_17 = arith.constant 0 : index
    %35 = vector.load %arg6[%c0_15, %c0_16, %c0_17] : memref<1x1x256xf32, #tpu.memory_space<vmem>>, vector<1x1x256xf32>
    %36 = vector.shape_cast %35 : vector<1x1x256xf32> to vector<1x256xf32>
    %37 = vector.shape_cast %34 : vector<1x256xf32> to vector<1x1x256xf32>
    tpu.vector_store %arg6[%c0_15, %c0_16, %c0_17], %37 {strides = array<i32>} : memref<1x1x256xf32, #tpu.memory_space<vmem>>, vector<1x1x256xf32>,
    return
  }
  func.func @transform_0(%arg0: i32, %arg1: i32) -> (i32, i32, i32) {
    %c0_i32 = arith.constant 0 : i32
    %c0_i32_0 = arith.constant 0 : i32
    return %arg0, %c0_i32, %arg1 : i32, i32, i32
  }
  func.func @transform_1(%arg0: i32, %arg1: i32) -> (i32, i32, i32) {
    %c0_i32 = arith.constant 0 : i32
    %c0_i32_0 = arith.constant 0 : i32
    return %arg0, %c0_i32, %arg1 : i32, i32, i32
  }
  func.func @transform_2(%arg0: i32, %arg1: i32) -> (i32, i32, i32) {
    %c0_i32 = arith.constant 0 : i32
    %c0_i32_0 = arith.constant 0 : i32
    return %arg0, %c0_i32, %arg1 : i32, i32, i32
  }
  func.func @transform_3(%arg0: i32, %arg1: i32) -> (i32, i32, i32) {
    %c0_i32 = arith.constant 0 : i32
    %c0_i32_0 = arith.constant 0 : i32
    return %arg0, %c0_i32, %arg1 : i32, i32, i32
  }
  func.func @transform_4(%arg0: i32, %arg1: i32) -> (i32, i32, i32) {
    %c0_i32 = arith.constant 0 : i32
    %c0_i32_0 = arith.constant 0 : i32
    return %arg0, %c0_i32, %arg1 : i32, i32, i32
  }
}

</mosaic_0001>

<llo_original>
// kernel: tpu_custom_call.1
$region0: #{tpu_custom_call.1}
  #allocation0 [shape = 'u32[]', space=smem, size = 0x4, offset = 0x4, fixed_abs, tag = 'smem constant byte address 0x4 - core index']
  #allocation1 [shape = 'u32[144,128]{1,0:T(1,128)}', space=vmem, size = 0x12000, scoped, tag = 'internal scratch']
  %s0 = inlined_call_operand.vmem [shape: f32[2,19,256], index: 0, kind: input, shape index: {}]
  %s1 = inlined_call_operand.vmem [shape: s32[2,1,256], index: 1, kind: input, shape index: {}]
  %s2 = inlined_call_operand.hbm [shape: f32[2,1,256], index: 2, kind: output, shape index: {0}]
  %s3 = inlined_call_operand.hbm [shape: f32[2,1,256], index: 3, kind: output, shape index: {1}]
  %s4 = inlined_call_operand.hbm [shape: f32[2,1,256], index: 4, kind: output, shape index: {2}]
  %5 = xla_tuple %s2, %s3, %s4
  %s6 = sld [smem:[#allocation0]]
  $region57: #{tpu_custom_call.1} parent=0
    _
  %s8 = ssub.s32 1, %s6
  %s9 = scalar_select 0, %s8, %s6
  $region1: #{tpu_custom_call.1} parent=0
    #allocation2 [shape = 'u8[2048]{0}', space=vmem, size = 0x800, scoped, tag = 'output window, operand 0']
    #allocation3 [shape = 's32[2]{0}', space=sflag, size = 0x8, scoped, tag = 'scoped memory for tpu_custom_call.1']
    #allocation4 [shape = 'u8[2048]{0}', space=vmem, size = 0x800, scoped, tag = 'output window, operand 1']
    #allocation5 [shape = 's32[2]{0}', space=sflag, size = 0x8, scoped, tag = 'scoped memory for tpu_custom_call.1']
    #allocation6 [shape = 'u8[2048]{0}', space=vmem, size = 0x800, scoped, tag = 'output window, operand 2']
    %10 = vsyncpa [#allocation3], 0
    %s11 = scalar_lea.sflag [#allocation3], 1
    %12 = vsyncpa %s11, 0
    %13 = vsyncpa [#allocation5], 0
    %s14 = scalar_lea.sflag [#allocation5], 1
    %15 = vsyncpa %s14, 0
    loop: start=0, step=1, limit=4
    $region2: #{tpu_custom_call.1} parent=1 // loop_pre_header
      _
    $region3: #{tpu_custom_call.1} parent=1 // loop_header
      %s17 = sphi 0, %s21
      %p18 = scmp.ge.s32.totalorder %s17, 4
      %s24 = sphi 0, %s36
      %s25 = sphi 0, %s32
      %s26 = sphi 0, %s24
      %s27 = sphi 0, %s25
      %s28 = sphi 0, %s26
      %s29 = sphi 0, %s27
      %s41 = sphi 0, %s43
      %s44 = sphi 0, %s41
      %s45 = sphi 0, %s44
      %s61 = sphi 0, %s45
      %s69 = sphi 0, %s71
      %s72 = sphi 0, %s69
      %s73 = sphi 0, %s72
      %s89 = sphi 0, %s73
      %s97 = sphi 0, %s99
      %s100 = sphi 0, %s97
      %s101 = sphi 0, %s100
      %s117 = sphi 0, %s101
      %s125 = sphi 0, %s127
      %s128 = sphi 0, %s125
      %s129 = sphi 0, %s128
      %s145 = sphi 0, %s129
      %s153 = sphi 0, %s155
      %s156 = sphi 0, %s153
      %s157 = sphi 0, %s156
      %s173 = sphi 0, %s157
    $region4: #{tpu_custom_call.1} parent=1 // loop_header_branch
      %20 = sbr.rel (%p18) target = $region8
    $region5: #{tpu_custom_call.1} parent=1 // loop_body
      %s22 = ssub.s32 %s17, 1
      %s23 = ssub.s32 %s17, 2
      %s30 = sadd.s32 1, %s25
      %p31 = scmp.ge.s32.totalorder %s30, 1
      %s32 = scalar_select %p31, 0, %s30
      %s33 = sadd.s32 1, %s24
      %s34 = scalar_select %p31, %s33, %s24
      %p35 = scmp.ge.s32.totalorder %s34, 2
      %s36 = scalar_select %p35, 0, %s34
      %s37 = ssub.s32 %s24, %s36
      %s38 = ssub.s32 %s25, %s32
      %s39 = sor.u32 %s37, %s38
      %p40 = scmp.eq.s32.totalorder %s39, 0
      %s42 = sadd.s32 %s41, 1
      %s43 = scalar_select %p40, %s41, %s42
      %p46 = pneg %p40
      %p47 = scmp.eq.s32.totalorder %s17, 1
      %p48 = por %p46, %p47
      %p49 = scmp.ne.s32.totalorder %s41, %s44
      %p50 = scmp.eq.s32.totalorder %s17, 0
      %p51 = por %p49, %p50
      %p52 = scmp.ne.s32.totalorder %s41, %s44
      %p53 = scmp.eq.s32.totalorder %s22, 1
      %p54 = por %p52, %p53
      %p55 = scmp.ne.s32.totalorder %s44, %s45
      %p56 = scmp.eq.s32.totalorder %s22, 0
      %p57 = por %p55, %p56
      %p58 = scmp.ne.s32.totalorder %s44, %s45
      %p59 = scmp.eq.s32.totalorder %s23, 1
      %p60 = por %p58, %p59
      %p62 = scmp.ne.s32.totalorder %s45, %s61
      %p63 = scmp.eq.s32.totalorder %s23, 0
      %p64 = por %p62, %p63
      %s65 = ssub.s32 %s24, %s36
      %s66 = ssub.s32 %s25, %s32
      %s67 = sor.u32 %s65, %s66
      %p68 = scmp.eq.s32.totalorder %s67, 0
      %s70 = sadd.s32 %s69, 1
      %s71 = scalar_select %p68, %s69, %s70
      %p74 = pneg %p68
      %p75 = scmp.eq.s32.totalorder %s17, 1
      %p76 = por %p74, %p75
      %p77 = scmp.ne.s32.totalorder %s69, %s72
      %p78 = scmp.eq.s32.totalorder %s17, 0
      %p79 = por %p77, %p78
      %p80 = scmp.ne.s32.totalorder %s69, %s72
      %p81 = scmp.eq.s32.totalorder %s22, 1
      %p82 = por %p80, %p81
      %p83 = scmp.ne.s32.totalorder %s72, %s73
      %p84 = scmp.eq.s32.totalorder %s22, 0
      %p85 = por %p83, %p84
      %p86 = scmp.ne.s32.totalorder %s72, %s73
      %p87 = scmp.eq.s32.totalorder %s23, 1
      %p88 = por %p86, %p87
      %p90 = scmp.ne.s32.totalorder %s73, %s89
      %p91 = scmp.eq.s32.totalorder %s23, 0
      %p92 = por %p90, %p91
      %s93 = ssub.s32 %s24, %s36
      %s94 = ssub.s32 %s25, %s32
      %s95 = sor.u32 %s93, %s94
      %p96 = scmp.eq.s32.totalorder %s95, 0
      %s98 = sadd.s32 %s97, 1
      %s99 = scalar_select %p96, %s97, %s98
      %p102 = pneg %p96
      %p103 = scmp.eq.s32.totalorder %s17, 1
      %p104 = por %p102, %p103
      %p105 = scmp.ne.s32.totalorder %s97, %s100
      %p106 = scmp.eq.s32.totalorder %s17, 0
      %p107 = por %p105, %p106
      %p108 = scmp.ne.s32.totalorder %s97, %s100
      %p109 = scmp.eq.s32.totalorder %s22, 1
      %p110 = por %p108, %p109
      %p111 = scmp.ne.s32.totalorder %s100, %s101
      %p112 = scmp.eq.s32.totalorder %s22, 0
      %p113 = por %p111, %p112
      %p114 = scmp.ne.s32.totalorder %s100, %s101
      %p115 = scmp.eq.s32.totalorder %s23, 1
      %p116 = por %p114, %p115
      %p118 = scmp.ne.s32.totalorder %s101, %s117
      %p119 = scmp.eq.s32.totalorder %s23, 0
      %p120 = por %p118, %p119
      %s121 = ssub.s32 %s24, %s36
      %s122 = ssub.s32 %s25, %s32
      %s123 = sor.u32 %s121, %s122
      %p124 = scmp.eq.s32.totalorder %s123, 0
      %s126 = sadd.s32 %s125, 1
      %s127 = scalar_select %p124, %s125, %s126
      %p130 = pneg %p124
      %p131 = scmp.eq.s32.totalorder %s17, 1
      %p132 = por %p130, %p131
      %p133 = scmp.ne.s32.totalorder %s125, %s128
      %p134 = scmp.eq.s32.totalorder %s17, 0
      %p135 = por %p133, %p134
      %p136 = scmp.ne.s32.totalorder %s125, %s128
      %p137 = scmp.eq.s32.totalorder %s22, 1
      %p138 = por %p136, %p137
      %p139 = scmp.ne.s32.totalorder %s128, %s129
      %p140 = scmp.eq.s32.totalorder %s22, 0
      %p141 = por %p139, %p140
      %p142 = scmp.ne.s32.totalorder %s128, %s129
      %p143 = scmp.eq.s32.totalorder %s23, 1
      %p144 = por %p142, %p143
      %p146 = scmp.ne.s32.totalorder %s129, %s145
      %p147 = scmp.eq.s32.totalorder %s23, 0
      %p148 = por %p146, %p147
      %s149 = ssub.s32 %s24, %s36
      %s150 = ssub.s32 %s25, %s32
      %s151 = sor.u32 %s149, %s150
      %p152 = scmp.eq.s32.totalorder %s151, 0
      %s154 = sadd.s32 %s153, 1
      %s155 = scalar_select %p152, %s153, %s154
      %p158 = pneg %p152
      %p159 = scmp.eq.s32.totalorder %s17, 1
      %p160 = por %p158, %p159
      %p161 = scmp.ne.s32.totalorder %s153, %s156
      %p162 = scmp.eq.s32.totalorder %s17, 0
      %p163 = por %p161, %p162
      %p164 = scmp.ne.s32.totalorder %s153, %s156
      %p165 = scmp.eq.s32.totalorder %s22, 1
      %p166 = por %p164, %p165
      %p167 = scmp.ne.s32.totalorder %s156, %s157
      %p168 = scmp.eq.s32.totalorder %s22, 0
      %p169 = por %p167, %p168
      %p170 = scmp.ne.s32.totalorder %s156, %s157
      %p171 = scmp.eq.s32.totalorder %s23, 1
      %p172 = por %p170, %p171
      %p174 = scmp.ne.s32.totalorder %s157, %s173
      %p175 = scmp.eq.s32.totalorder %s23, 0
      %p176 = por %p174, %p175
      %p177 = scmp.le.s32.totalorder 1, %s17
      %p178 = scmp.lt.s32.totalorder %s17, 3
      %p179 = pnand %p177, %p178
      %p180 = pneg %p179
      // Predicated region
      $region9: #{tpu_custom_call.1} parent=5 // pred_check
        _
      $region10: #{tpu_custom_call.1} parent=5 // pred_check_branch
        %182 = sbr.rel (%p179) target = $region12
      $region11: #{tpu_custom_call.1} parent=5 // pred_region
        %s183 = ssub.s32 %s17, 1
      $region12: #{tpu_custom_call.1} parent=5 // pred_fallthru
        _
      %p184 = scmp.lt.s32.totalorder %s17, 2
      // Predicated region
      $region13: #{tpu_custom_call.1} parent=5 // pred_check
        %p185 = pneg %p184
      $region14: #{tpu_custom_call.1} parent=5 // pred_check_branch
        %187 = sbr.rel (%p185) target = $region16
      $region15: #{tpu_custom_call.1} parent=5 // pred_region
        // Predicated region
        $region17: #{tpu_custom_call.1} parent=15 // pred_check
          %p188 = pneg %p51
        $region18: #{tpu_custom_call.1} parent=15 // pred_check_branch
          %190 = sbr.rel (%p188) target = $region20
        $region19: #{tpu_custom_call.1} parent=15 // pred_region
          %s191 = smul.u32 2, %s25
          %p192 = scmp.lt.s32.totalorder %s24, 1
          %s193 = scalar_select %p192, %s24, 1
          %p194 = scmp.lt.s32.totalorder %s191, 1
          %s195 = scalar_select %p194, %s191, 1
          %s196 = smul.addr %s193, 6
          %s197 = sadd.s32 %s195, %s196
          %s198 = smul.addr %s197, 8
          %s199 = scalar_lea.vmem %s0, %s198
          %s200 = smul.u32 2, %s25
        $region20: #{tpu_custom_call.1} parent=15 // pred_fallthru
          _
        // Predicated region
        $region21: #{tpu_custom_call.1} parent=15 // pred_check
          %p201 = pneg %p79
        $region22: #{tpu_custom_call.1} parent=15 // pred_check_branch
          %203 = sbr.rel (%p201) target = $region24
        $region23: #{tpu_custom_call.1} parent=15 // pred_region
          %s204 = smul.u32 2, %s25
          %p205 = scmp.lt.s32.totalorder %s24, 1
          %s206 = scalar_select %p205, %s24, 1
          %p207 = scmp.lt.s32.totalorder %s204, 1
          %s208 = scalar_select %p207, %s204, 1
          %s209 = smul.addr %s206, 2
          %s210 = sadd.s32 %s208, %s209
          %s211 = scalar_lea.vmem %s1, %s210
          %s212 = smul.u32 2, %s25
        $region24: #{tpu_custom_call.1} parent=15 // pred_fallthru
          _
      $region16: #{tpu_custom_call.1} parent=5 // pred_fallthru
        _
      %p213 = scmp.le.s32.totalorder 1, %s17
      %p214 = scmp.lt.s32.totalorder %s17, 3
      %p215 = pnand %p213, %p214
      %p216 = pneg %p215
      // Predicated region
      $region25: #{tpu_custom_call.1} parent=5 // pred_check
        _
      $region26: #{tpu_custom_call.1} parent=5 // pred_check_branch
        %218 = sbr.rel (%p215) target = $region28
      $region27: #{tpu_custom_call.1} parent=5 // pred_region
        %s219 = ssub.s32 %s17, 1
        %s220 = smul.u32 2, %s27
        %p221 = scmp.lt.s32.totalorder %s26, 1
        %s222 = scalar_select %p221, %s26, 1
        %p223 = scmp.lt.s32.totalorder %s220, 1
        %s224 = scalar_select %p223, %s220, 1
        %s225 = smul.addr %s222, 6
        %s226 = sadd.s32 %s224, %s225
        %s227 = smul.addr %s226, 8
        %s228 = scalar_lea.vmem %s0, %s227
        %p229 = pneg %p57
        %p230 = pneg %p54
        %s231 = smul.u32 2, %s27
        %p232 = scmp.lt.s32.totalorder %s26, 1
        %s233 = scalar_select %p232, %s26, 1
        %p234 = scmp.lt.s32.totalorder %s231, 1
        %s235 = scalar_select %p234, %s231, 1
        %s236 = smul.addr %s233, 2
        %s237 = sadd.s32 %s235, %s236
        %s238 = scalar_lea.vmem %s1, %s237
        %p239 = pneg %p85
        %p240 = pneg %p82
        %p241 = pneg %p113
        %p242 = pneg %p110
        %s243 = sand.u32 %s100, 1
        %s244 = scalar_lea.sflag [#allocation3], %s243
        %s245 = sand.u32 %s100, 1
        %s246 = smul.addr %s245, 2
        %s247 = scalar_lea.vmem [#allocation2], %s246
        %p248 = pneg %p141
        %p249 = pneg %p138
        %s250 = sand.u32 %s22, 1
        %s251 = scalar_lea.sflag [#allocation5], %s250
        %s252 = sand.u32 %s128, 1
        %s253 = smul.addr %s252, 2
        %s254 = scalar_lea.vmem [#allocation4], %s253
        %p255 = pneg %p169
        %p256 = pneg %p166
        %s257 = sand.u32 %s22, 1
        %s258 = scalar_lea.sflag [#allocation5], %s257
        %s259 = sand.u32 %s156, 1
        %s260 = smul.addr %s259, 2
        %s261 = scalar_lea.vmem [#allocation6], %s260
        %s262 = smul.u32 2, %s27
        %p263 = scmp.lt.s32.totalorder %s26, 1
        %s264 = scalar_select %p263, %s26, 1
        %p265 = scmp.lt.s32.totalorder %s262, 1
        %s266 = scalar_select %p265, %s262, 1
        %s267 = smul.addr %s264, 6
        %s268 = sadd.s32 %s266, %s267
        %s269 = smul.addr %s268, 8
        %s270 = scalar_lea.vmem %s0, %s269
        %s271 = smul.u32 2, %s27
        %s272 = smul.u32 2, %s27
        %p273 = scmp.lt.s32.totalorder %s26, 1
        %s274 = scalar_select %p273, %s26, 1
        %p275 = scmp.lt.s32.totalorder %s272, 1
        %s276 = scalar_select %p275, %s272, 1
        %s277 = smul.addr %s274, 2
        %s278 = sadd.s32 %s276, %s277
        %s279 = scalar_lea.vmem %s1, %s278
        %s280 = smul.u32 2, %s27
        %s281 = smul.u32 2, %s27
        %s282 = smul.u32 2, %s27
        %s283 = smul.u32 2, %s27
        %v284 = vld [vmem:[%s270] sm:$0xff]
        %v285 = vld [vmem:[%s270 + $0x8] sm:$0xff]
        %v286 = vld [vmem:[%s270 + $0x10] sm:$0xff]
        %v287 = vld [vmem:[%s270 + $0x18] sm:$0xff]
        %v288 = vld [vmem:[%s270 + $0x20] sm:$0x7]
        %v289 = vld [vmem:[%s270 + $0x28] sm:$0x7]
        %v290 = vld [vmem:[%s279] sm:$0x3]
        %vm291 = vcmp.ne.s32.totalorder %v290, 255
        %v292 = vlaneseq
        %v293 = vshrl.u32 %v292, 7
        %v294 = vadd.s32 %v293, 8
        %v295 = vadd.s32 %v293, 16
        %v296 = vlaneseq
        %v297 = vshrl.u32 %v296, 7
        %v298 = vsub.s32 0, %v297
        %v299 = vrot.slane %v290, %v298
        %v300 = vlaneseq
        %v301 = vshrl.u32 %v300, 7
        %v302 = vsub.s32 1, %v301
        %v303 = vrot.slane %v290, %v302
        %vm304 = vcmp.eq.s32.totalorder %v293, %v299
        %vm305 = vcmp.eq.s32.totalorder %v293, %v303
        %vm306 = vcmp.eq.s32.totalorder %v294, %v299
        %vm307 = vcmp.eq.s32.totalorder %v294, %v303
        %vm308 = vcmp.eq.s32.totalorder %v295, %v299
        %vm309 = vcmp.eq.s32.totalorder %v295, %v303
        %vm310 = vcmask 1042432
        %v311 = vsel %vm310, %v288, -inf
        %v312 = vmax.f32 %v284, %v311
        %v313 = vmax.f32 %v312, %v286
        %v314 = vrot.slane %v313, 4
        %v315 = vmax.f32 %v313, %v314
        %v316 = vrot.slane %v315, 2
        %v317 = vmax.f32 %v315, %v316
        %v318 = vrot.slane %v317, 1
        %v319 = vmax.f32 %v317, %v318
        %v320 = vsel %vm310, %v289, -inf
        %v321 = vmax.f32 %v285, %v320
        %v322 = vmax.f32 %v321, %v287
        %v323 = vrot.slane %v322, 4
        %v324 = vmax.f32 %v322, %v323
        %v325 = vrot.slane %v324, 2
        %v326 = vmax.f32 %v324, %v325
        %v327 = vrot.slane %v326, 1
        %v328 = vmax.f32 %v326, %v327
        %v329 = vsub.f32 %v284, %v319
        %v330 = vsub.f32 %v285, %v328
        %v331 = vsub.f32 %v286, %v319
        %v332 = vsub.f32 %v287, %v328
        %v333 = vsub.f32 %v288, %v319
        %v334 = vsub.f32 %v289, %v328
        %v335 = vmul.f32 %v329, 1.442695
        %v336 = vpow.pop %v335
        %v337 = vmul.f32 %v330, 1.442695
        %v338 = vpow.pop %v337
        %v339 = vmul.f32 %v331, 1.442695
        %v340 = vpow.pop %v339
        %v341 = vmul.f32 %v332, 1.442695
        %v342 = vpow.pop %v341
        %v343 = vmul.f32 %v333, 1.442695
        %v344 = vpow.pop %v343
        %v345 = vmul.f32 %v334, 1.442695
        %v346 = vpow.pop %v345
        %v347 = vadd.f32 %v336, %v340
        %v348 = vsel %vm310, %v344, 0.0
        %v349 = vadd.f32 %v347, %v348
        %v350 = vrot.slane %v349, 4
        %v351 = vadd.f32 %v349, %v350
        %v352 = vrot.slane %v351, 2
        %v353 = vadd.f32 %v351, %v352
        %v354 = vrot.slane %v353, 1
        %v355 = vadd.f32 %v353, %v354
        %v356 = vadd.f32 %v338, %v342
        %v357 = vsel %vm310, %v346, 0.0
        %v358 = vadd.f32 %v356, %v357
        %v359 = vrot.slane %v358, 4
        %v360 = vadd.f32 %v358, %v359
        %v361 = vrot.slane %v360, 2
        %v362 = vadd.f32 %v360, %v361
        %v363 = vrot.slane %v362, 1
        %v364 = vadd.f32 %v362, %v363
        %v365 = vlog2.pop %v355
        %v366 = vmul.f32 %v365, 0.6931472
        %v367 = vlog2.pop %v364
        %v368 = vmul.f32 %v367, 0.6931472
        %v369 = vadd.f32 %v319, %v366
        %v370 = vadd.f32 %v328, %v368
        %v371 = vsel %vm304, %v284, 0.0
        %v372 = vsel %vm305, %v285, 0.0
        %v373 = vsel %vm306, %v286, 0.0
        %v374 = vsel %vm307, %v287, 0.0
        %v375 = vsel %vm308, %v288, 0.0
        %v376 = vsel %vm309, %v289, 0.0
        %v377 = vadd.f32 %v371, %v373
        %v378 = vsel %vm310, %v375, 0.0
        %v379 = vadd.f32 %v377, %v378
        %v380 = vrot.slane %v379, 4
        %v381 = vadd.f32 %v379, %v380
        %v382 = vrot.slane %v381, 2
        %v383 = vadd.f32 %v381, %v382
        %v384 = vrot.slane %v383, 1
        %v385 = vadd.f32 %v383, %v384
        %v386 = vadd.f32 %v372, %v374
        %v387 = vsel %vm310, %v376, 0.0
        %v388 = vadd.f32 %v386, %v387
        %v389 = vrot.slane %v388, 4
        %v390 = vadd.f32 %v388, %v389
        %v391 = vrot.slane %v390, 2
        %v392 = vadd.f32 %v390, %v391
        %v393 = vrot.slane %v392, 1
        %v394 = vadd.f32 %v392, %v393
        %v395 = vsub.f32 %v369, %v385
        %v396 = vsub.f32 %v370, %v394
        %v399 = vcombine.low %v395, %v396
        %v401 = vunpack.c.l.s4 1966171168
        %v402 = vunpack.c.0.s8 %v401
        %v403 = vlaneseq
        %v404 = vshrl.u32 %v403, 7
        %v405 = vsub.s32 %v402, %v404
        %v406 = vrot.slane %v399, %v405
        %v408 = vunpack.c.l.s4 1966171168
        %v409 = vunpack.c.0.s8 %v408
        %v410 = vlaneseq
        %v411 = vshrl.u32 %v410, 7
        %v412 = vsub.s32 %v409, %v411
        %v413 = vrot.slane %v406, %v412
        %v415 = vlaneseq
        %vm416 = vcmp.ge.s32.totalorder %v415, 0
        %vm417 = vcmp.lt.s32.totalorder %v415, 256
        %vm418 = vmand %vm416, %vm417
        %419 = vst.msk [vmem:[%s254] sm:$0x3] %vm418, %v413
        %v420 = vsub.f32 %v385, %v369
        %v421 = vsub.f32 %v394, %v370
        %v422 = vmul.f32 %v420, 1.442695
        %v423 = vpow.pop %v422
        %v424 = vmul.f32 %v421, 1.442695
        %v425 = vpow.pop %v424
        %v428 = vcombine.low %v423, %v425
        %v430 = vunpack.c.l.s4 1966171168
        %v431 = vunpack.c.0.s8 %v430
        %v432 = vlaneseq
        %v433 = vshrl.u32 %v432, 7
        %v434 = vsub.s32 %v431, %v433
        %v435 = vrot.slane %v428, %v434
        %v437 = vunpack.c.l.s4 1966171168
        %v438 = vunpack.c.0.s8 %v437
        %v439 = vlaneseq
        %v440 = vshrl.u32 %v439, 7
        %v441 = vsub.s32 %v438, %v440
        %v442 = vrot.slane %v435, %v441
        %v444 = vsel %vm291, %v442, 1.0
        %445 = vst.msk [vmem:[%s247] sm:$0x3] %vm418, %v444
        %v446 = vsel %vm291, 1, 0
        %v447 = vcvt.s32.f32 %v446
        %448 = vst.msk [vmem:[%s261] sm:$0x3] %vm418, %v447
        %s449 = sand.u32 %s100, 1
        %s450 = scalar_lea.sflag [#allocation3], %s449
        %s451 = sand.u32 %s100, 1
        %s452 = smul.addr %s451, 2
        %s453 = scalar_lea.vmem [#allocation2], %s452
        %s454 = sand.u32 %s22, 1
        %s455 = scalar_lea.sflag [#allocation5], %s454
        %s456 = sand.u32 %s128, 1
        %s457 = smul.addr %s456, 2
        %s458 = scalar_lea.vmem [#allocation4], %s457
        %s459 = sand.u32 %s22, 1
        %s460 = scalar_lea.sflag [#allocation5], %s459
        %s461 = sand.u32 %s156, 1
        %s462 = smul.addr %s461, 2
        %s463 = scalar_lea.vmem [#allocation6], %s462
        // Predicated region
        $region29: #{tpu_custom_call.1} parent=27 // pred_check
          %p464 = pneg %p110
        $region30: #{tpu_custom_call.1} parent=27 // pred_check_branch
          %466 = sbr.rel (%p464) target = $region32
        $region31: #{tpu_custom_call.1} parent=27 // pred_region
          %s467 = smul.u32 2, %s27
          %s469 = ssub.s32 32, 32
          %470 = vsyncadd %s450, %s469
          %s471 = smul.addr %s26, 2
          %s472 = sadd.s32 %s467, %s471
          %s473 = smul.addr %s472, 16
          %s474 = scalar_lea.hbm %s2, %s473
          %s476 = sshll.u32 %s453, 4
          %s477 = int_to_ptr.vmem [resolvable:$true] %s476
          %479 = dma.vmem_to_hbm [thread:$0]  %s477, 32, %s474, %s450
        $region32: #{tpu_custom_call.1} parent=27 // pred_fallthru
          _
        // Predicated region
        $region33: #{tpu_custom_call.1} parent=27 // pred_check
          %p480 = pneg %p138
        $region34: #{tpu_custom_call.1} parent=27 // pred_check_branch
          %482 = sbr.rel (%p480) target = $region36
        $region35: #{tpu_custom_call.1} parent=27 // pred_region
          %s483 = smul.u32 2, %s27
          %s485 = ssub.s32 32, 32
          %486 = vsyncadd %s455, %s485
          %s487 = smul.addr %s26, 2
          %s488 = sadd.s32 %s483, %s487
          %s489 = smul.addr %s488, 16
          %s490 = scalar_lea.hbm %s3, %s489
          %s492 = sshll.u32 %s458, 4
          %s493 = int_to_ptr.vmem [resolvable:$true] %s492
          %495 = dma.vmem_to_hbm [thread:$0]  %s493, 32, %s490, %s455
        $region36: #{tpu_custom_call.1} parent=27 // pred_fallthru
          _
        // Predicated region
        $region37: #{tpu_custom_call.1} parent=27 // pred_check
          %p496 = pneg %p166
        $region38: #{tpu_custom_call.1} parent=27 // pred_check_branch
          %498 = sbr.rel (%p496) target = $region40
        $region39: #{tpu_custom_call.1} parent=27 // pred_region
          %s499 = smul.u32 2, %s27
          %s501 = ssub.s32 32, 32
          %502 = vsyncadd %s460, %s501
          %s503 = smul.addr %s26, 2
          %s504 = sadd.s32 %s499, %s503
          %s505 = smul.addr %s504, 16
          %s506 = scalar_lea.hbm %s4, %s505
          %s508 = sshll.u32 %s463, 4
          %s509 = int_to_ptr.vmem [resolvable:$true] %s508
          %511 = dma.vmem_to_hbm [thread:$0]  %s509, 32, %s506, %s460
        $region40: #{tpu_custom_call.1} parent=27 // pred_fallthru
          _
      $region28: #{tpu_custom_call.1} parent=5 // pred_fallthru
        _
      %p512 = scmp.le.s32.totalorder 2, %s17
      // Predicated region
      $region41: #{tpu_custom_call.1} parent=5 // pred_check
        %p513 = pneg %p512
      $region42: #{tpu_custom_call.1} parent=5 // pred_check_branch
        %515 = sbr.rel (%p513) target = $region44
      $region43: #{tpu_custom_call.1} parent=5 // pred_region
        %s516 = ssub.s32 %s17, 2
        // Predicated region
        $region45: #{tpu_custom_call.1} parent=43 // pred_check
          %p517 = pneg %p116
        $region46: #{tpu_custom_call.1} parent=43 // pred_check_branch
          %519 = sbr.rel (%p517) target = $region48
        $region47: #{tpu_custom_call.1} parent=43 // pred_region
          %s520 = sand.u32 %s101, 1
          %s521 = scalar_lea.sflag [#allocation3], %s520
          %s522 = sand.u32 %s101, 1
          %s523 = smul.addr %s522, 2
          %s524 = scalar_lea.vmem [#allocation2], %s523
          %525 = dma.done %s521, 32
        $region48: #{tpu_custom_call.1} parent=43 // pred_fallthru
          _
        // Predicated region
        $region49: #{tpu_custom_call.1} parent=43 // pred_check
          %p526 = pneg %p144
        $region50: #{tpu_custom_call.1} parent=43 // pred_check_branch
          %528 = sbr.rel (%p526) target = $region52
        $region51: #{tpu_custom_call.1} parent=43 // pred_region
          %s529 = sand.u32 %s23, 1
          %s530 = scalar_lea.sflag [#allocation5], %s529
          %s531 = sand.u32 %s129, 1
          %s532 = smul.addr %s531, 2
          %s533 = scalar_lea.vmem [#allocation4], %s532
          %534 = dma.done %s530, 32
        $region52: #{tpu_custom_call.1} parent=43 // pred_fallthru
          _
        // Predicated region
        $region53: #{tpu_custom_call.1} parent=43 // pred_check
          %p535 = pneg %p172
        $region54: #{tpu_custom_call.1} parent=43 // pred_check_branch
          %537 = sbr.rel (%p535) target = $region56
        $region55: #{tpu_custom_call.1} parent=43 // pred_region
          %s538 = sand.u32 %s23, 1
          %s539 = scalar_lea.sflag [#allocation5], %s538
          %s540 = sand.u32 %s157, 1
          %s541 = smul.addr %s540, 2
          %s542 = scalar_lea.vmem [#allocation6], %s541
          %543 = dma.done %s539, 32
        $region56: #{tpu_custom_call.1} parent=43 // pred_fallthru
          _
      $region44: #{tpu_custom_call.1} parent=5 // pred_fallthru
        _
    $region6: #{tpu_custom_call.1} parent=1 // loop_footer
      %s21 = sadd.s32 1, %s17
    $region7: #{tpu_custom_call.1} parent=1 // loop_footer_branch
      %16 = sbr.rel target = $region3
    $region8: #{tpu_custom_call.1} parent=1 // loop_exit
      _
    %544 = vsyncpa [#allocation3], 1
    %s545 = scalar_lea.sflag [#allocation3], 1
    %546 = vsyncpa %s545, 1
    %547 = vsyncpa [#allocation5], 1
    %s548 = scalar_lea.sflag [#allocation5], 1
    %549 = vsyncpa %s548, 1

</llo_original>
